<compile_context>
chip_gen: v6e
topology: v6e:2x2x1
jax: 0.10.0
libtpu: 0.0.40
codegen_flags: <defaults>
</compile_context>

<pallas_src>
import functools
import numpy as np
import jax
import jax.numpy as jnp
from jax.experimental import pallas as pl
from jax.experimental.pallas import tpu as pltpu


def _round_up(x, m):
    return (x + m - 1) // m * m


def _default_tile_rows():
    # v5e/v6e: 128 MiB VMEM -> bigger row tiles amortize the ~0.35us/step
    # overhead (and 1024 is a multiple of 256 for the v6e MXU).
    # v7x: 64 MiB/TC -> stay at 512.
    try:
        kind = jax.devices()[0].device_kind.lower()
    except Exception:
        return 512
    return 512 if "v7" in kind else 1024


# -------------------- Pallas kernel --------------------

def _bert_phoneme_emb_kernel(wid_smem, sids_ref, table_ref, gamma_ref, beta_ref,
                             word_hbm, out_ref, gbuf, sem, *, eps, tile_n):
    i = pl.program_id(0)
    base = i * tile_n

    # 1) Issue one row-gather DMA per token: HBM word table -> VMEM scratch.
    #    Row indices come from the scalar-prefetched word ids in SMEM.
    # TODO(synk): cross-grid-step double-buffering of this gather (prefetch
    # tile i+1 while computing tile i) would hide it fully, but needs per-core
    # priming under megacore sharding; here it only overlaps with step (2).
    def issue(r, _):
        row = wid_smem[base + r]
        pltpu.make_async_copy(word_hbm.at[row], gbuf.at[r], sem.at[0]).start()
        return 0
    jax.lax.fori_loop(0, tile_n, issue, 0)

    # 2) token-type / phoneme-pitch / position: fused gather-and-sum as ONE
    #    one-hot MXU matmul over the small stacked table (runs while the word
    #    row DMAs are in flight).  The three id segments are disjoint, so the
    #    OR of the compares is an exact combined one-hot.
    v_small = table_ref.shape[0]
    iota = jax.lax.broadcasted_iota(jnp.int32, (1, v_small), 1)
    sids = sids_ref[...]                                     # (tile_n, 3) int32
    onehot = ((sids[:, 0:1] == iota)
              | (sids[:, 1:2] == iota)
              | (sids[:, 2:3] == iota)).astype(jnp.float32)
    # (Option for v6e/v7x throughput: cast one-hot and table to bf16 with f32
    #  accumulation — changes the gather to bf16-rounded table values.)
    emb = jnp.dot(onehot, table_ref[...], preferred_element_type=jnp.float32)

    # 3) Drain the word-row gather and add the word embeddings.
    def drain(r, _):
        pltpu.make_async_copy(word_hbm.at[0], gbuf.at[0], sem.at[0]).wait()
        return 0
    jax.lax.fori_loop(0, tile_n, drain, 0)
    emb = emb + gbuf[...]

    # 4) LayerNorm over the real hidden dim (no padding -> no correction term,
    #    variance is a true sum of squares so it cannot go negative).
    h = emb.shape[-1]
    inv_h = jnp.float32(1.0 / h)
    mean = jnp.sum(emb, axis=-1, keepdims=True) * inv_h
    cent = emb - mean
    var = jnp.sum(cent * cent, axis=-1, keepdims=True) * inv_h
    norm = cent * jax.lax.rsqrt(var + jnp.float32(eps))
    out_ref[...] = (norm * gamma_ref[...] + beta_ref[...]).astype(out_ref.dtype)


# -------------------- parameter packing (done ONCE, at load time) --------------------

def pack_small_tables(type_tab, pitch_tab, pos_tab, gamma, beta):
    """Stack the small-vocab tables (type/pitch/position) into one zero-padded
    (V_small_pad, H) table and reshape gamma/beta.  Hoisted out of the per-call
    path so its HBM traffic is paid once at parameter-load time."""
    Vt, H = type_tab.shape
    Vp = pitch_tab.shape[0]
    Vq = pos_tab.shape[0]
    V = Vt + Vp + Vq
    V_pad = _round_up(V, 128)          # lane-dense one-hot / clean MXU contraction
    tab = jnp.zeros((V_pad, H), jnp.float32)
    tab = tab.at[:Vt].set(type_tab.astype(jnp.float32))
    tab = tab.at[Vt:Vt + Vp].set(pitch_tab.astype(jnp.float32))
    tab = tab.at[Vt + Vp:V].set(pos_tab.astype(jnp.float32))
    return {
        "small_table": tab,
        "gamma": gamma.reshape(1, H).astype(jnp.float32),
        "beta": beta.reshape(1, H).astype(jnp.float32),
        "sizes": (Vt, Vp, Vq),
    }


# -------------------- wrapper --------------------

def bert_phoneme_embeddings(input_ids, token_type_ids, position_ids, pitch_ids,
                            word_tab, packed, *, eps=1e-12, tile_n=None,
                            out_dtype=jnp.float32):
    # out_dtype=jnp.bfloat16 halves the HBM writeback (worth most on v7x) if
    # downstream consumers accept bf16; kept f32 here to match the module.
    B, S = input_ids.shape
    Vw, H = word_tab.shape
    Vt, Vp, Vq = packed["sizes"]
    small_table = packed["small_table"]
    V_pad = small_table.shape[0]
    N = B * S

    if tile_n is None:
        tile_n = _default_tile_rows()
    TILE_N = min(tile_n, _round_up(N, 8))
    N_pad = _round_up(N, TILE_N)

    # Word ids -> scalar prefetch (SMEM); they drive the HBM row-gather DMAs.
    wid = jnp.clip(input_ids.reshape(N).astype(jnp.int32), 0, Vw - 1)
    wid = jnp.pad(wid, (0, N_pad - N))

    # Small-vocab ids packed into ONE (N_pad, 3) int32 operand, offset into the
    # concatenated small table.  Out-of-range ids are clamped (documented
    # difference vs torch.nn.Embedding, which would raise for the pitch ids).
    def clip_off(x, size, off):
        return jnp.clip(x.reshape(N).astype(jnp.int32), 0, size - 1) + off
    small_ids = jnp.stack([clip_off(token_type_ids, Vt, 0),
                           clip_off(pitch_ids, Vp, Vt),
                           clip_off(position_ids, Vq, Vt + Vp)], axis=-1)
    small_ids = jnp.pad(small_ids, ((0, N_pad - N), (0, 0)))

    grid = (N_pad // TILE_N,)
    kernel = functools.partial(_bert_phoneme_emb_kernel, eps=eps, tile_n=TILE_N)

    out = pl.pallas_call(
        kernel,
        out_shape=jax.ShapeDtypeStruct((N_pad, H), out_dtype),
        grid_spec=pltpu.PrefetchScalarGridSpec(
            num_scalar_prefetch=1,                                  # word ids
            grid=grid,
            in_specs=[
                pl.BlockSpec((TILE_N, 3), lambda i, wid: (i, 0)),   # packed ids
                pl.BlockSpec((V_pad, H), lambda i, wid: (0, 0)),    # small table (resident)
                pl.BlockSpec((1, H), lambda i, wid: (0, 0)),        # gamma
                pl.BlockSpec((1, H), lambda i, wid: (0, 0)),        # beta
                pl.BlockSpec(memory_space=pl.ANY),                  # word table stays in HBM
            ],
            out_specs=pl.BlockSpec((TILE_N, H), lambda i, wid: (i, 0)),
            scratch_shapes=[
                pltpu.VMEM((TILE_N, H), jnp.float32),               # gathered word rows
                pltpu.SemaphoreType.DMA((1,)),                      # gather completion
            ],
        ),
        compiler_params=pltpu.CompilerParams(
            dimension_semantics=("parallel",),   # v7x: shard the row grid over 2 TCs
            vmem_limit_bytes=32 * 1024 * 1024,   # safe on all gens; fits the tiles above
        ),
    )(wid, small_ids, small_table, packed["gamma"], packed["beta"],
      word_tab.astype(jnp.float32))

    return out[:N].reshape(B, S, H)


# -------------------- host-side glue (matches the PyTorch defaults) --------------------

def compute_phoneme_pitch_ids(input_ids_np):
    """Exact replication of the data-dependent Python loop in the reference forward."""
    # TODO(synk): this sequential, data-dependent loop has no clean Pallas
    # equivalent; it is computed on host exactly as in the PyTorch module.
    id_phoneme_pitch_map = {1: 5, 2: 8, 3: 33, 4: 18, 5: 6, 6: 12}
    phoneme_pitch_id_map = {v: k for k, v in id_phoneme_pitch_map.items()}
    B, S = input_ids_np.shape
    pitch = np.ones((B, S), dtype=np.int64)
    for i in range(B):
        begin = 0
        end = 0
        for j in range(S):
            value = int(input_ids_np[i, j])
            if value in id_phoneme_pitch_map.values() and value != 1:
                pitch[i, begin:end] *= phoneme_pitch_id_map[value]
                begin = j
            elif value == 1:
                pitch[i, begin:] *= 0
                continue
            else:
                end = j + 1
    return pitch.astype(np.int32)


def reference_forward(input_ids, token_type_ids, position_ids, pitch_ids,
                      word_tab, pos_tab, pitch_tab, type_tab, gamma, beta, eps):
    emb = (word_tab[input_ids] + type_tab[token_type_ids]
           + pitch_tab[jnp.clip(pitch_ids, 0, pitch_tab.shape[0] - 1)]
           + pos_tab[position_ids])
    mean = jnp.mean(emb, axis=-1, keepdims=True)
    var = jnp.mean((emb - mean) ** 2, axis=-1, keepdims=True)
    norm = (emb - mean) / jnp.sqrt(var + eps)
    return norm * gamma + beta


# -------------------- main --------------------

if __name__ == "__main__":
    # Synthetic config (small, consistent with BertPhonemeEmbeddings.__init__).
    vocab_size = 40
    hidden_size = 32
    max_position_embeddings = 64
    type_vocab_size = 2
    pad_token_id = 0
    layer_norm_eps = 1e-12
    B, S = 2, 8

    key = jax.random.PRNGKey(0)
    k_ids, k_w, k_p, k_pp, k_t = jax.random.split(key, 5)

    # Deterministic parameter init (N(0, 0.02), like BERT); padding row zeroed.
    word_tab = 0.02 * jax.random.normal(k_w, (vocab_size, hidden_size), jnp.float32)
    word_tab = word_tab.at[pad_token_id].set(0.0)
    pos_tab = 0.02 * jax.random.normal(k_p, (max_position_embeddings, hidden_size), jnp.float32)
    pitch_tab = 0.02 * jax.random.normal(k_pp, (max_position_embeddings, hidden_size), jnp.float32)
    type_tab = 0.02 * jax.random.normal(k_t, (type_vocab_size, hidden_size), jnp.float32)
    gamma = jnp.ones((hidden_size,), jnp.float32)
    beta = jnp.zeros((hidden_size,), jnp.float32)

    # One-time parameter packing (parameter-load time, NOT per forward call).
    packed = pack_small_tables(type_tab, pitch_tab, pos_tab, gamma, beta)

    # Inputs: call with only input_ids (all other args default to None, as in the
    # module): token_type_ids -> zeros, position_ids -> arange, pitch ids -> loop.
    input_ids = jax.random.randint(k_ids, (B, S), 0, vocab_size, dtype=jnp.int32)
    token_type_ids = jnp.zeros((B, S), jnp.int32)
    position_ids = jnp.broadcast_to(jnp.arange(S, dtype=jnp.int32)[None, :], (B, S))
    pitch_ids = jnp.asarray(compute_phoneme_pitch_ids(np.asarray(input_ids)))

    out = bert_phoneme_embeddings(
        input_ids, token_type_ids, position_ids, pitch_ids,
        word_tab, packed, eps=layer_norm_eps)
    out = jax.block_until_ready(out)

    ref = reference_forward(input_ids, token_type_ids, position_ids, pitch_ids,
                            word_tab, pos_tab, pitch_tab, type_tab, gamma, beta,
                            layer_norm_eps)
    assert out.shape == (B, S, hidden_size)
    np.testing.assert_allclose(np.asarray(out), np.asarray(ref), atol=1e-5, rtol=1e-5)
    print("KERNEL_OK")
</pallas_src>

<mosaic_0001>
module attributes {stable_mosaic.version = 11 : i64} {
  func.func @_bert_phoneme_emb_kernel(%arg0: i32, %arg1: memref<16xi32, #tpu.memory_space<smem>>, %arg2: memref<16x3xi32, #tpu.memory_space<vmem>>, %arg3: memref<256x32xf32, #tpu.memory_space<vmem>>, %arg4: memref<1x32xf32, #tpu.memory_space<vmem>>, %arg5: memref<1x32xf32, #tpu.memory_space<vmem>>, %arg6: memref<40x32xf32, #tpu.memory_space<any>>, %arg7: memref<16x32xf32, #tpu.memory_space<vmem>>, %arg8: memref<16x32xf32, #tpu.memory_space<vmem>>, %arg9: memref<1x!tpu.dma_semaphore, #tpu.memory_space<semaphore_mem>>) attributes {dimension_semantics = [#tpu.dimension_semantics<parallel>], iteration_bounds = array<i64: 1>, scalar_prefetch = 1 : i64, scratch_operands = 2 : i64, tpu.core_type = #tpu.core_type<tc>, window_params = [{transform_indices = @transform_0, window_bounds = array<i64: 16, 3>}, {pipeline_mode = #tpu.pipeline_mode<synchronous>, transform_indices = @transform_1, window_bounds = array<i64: 256, 32>}, {pipeline_mode = #tpu.pipeline_mode<synchronous>, transform_indices = @transform_2, window_bounds = array<i64: 1, 32>}, {pipeline_mode = #tpu.pipeline_mode<synchronous>, transform_indices = @transform_3, window_bounds = array<i64: 1, 32>}, {}, {transform_indices = @transform_5, window_bounds = array<i64: 16, 32>}]} {
    %c16_i32 = arith.constant 16 : i32
    %0 = arith.muli %arg0, %c16_i32 : i32
    %c0_i32 = arith.constant 0 : i32
    %c16_i32_0 = arith.constant 16 : i32
    %1 = arith.addi %c0_i32, %c16_i32_0 : i32
    %c1_i32 = arith.constant 1 : i32
    scf.for %arg10 = %c0_i32 to %1 step %c1_i32  : i32 {
      %48 = arith.addi %0, %arg10 : i32
      %49 = arith.index_cast %48 : i32 to index
      %50 = memref.load %arg1[%49] : memref<16xi32, #tpu.memory_space<smem>>
      %c0_i32_21 = arith.constant 0 : i32
      %c0_i32_22 = arith.constant 0 : i32
      %51 = tpu.memref_slice %arg6[%50, %c0_i32_22] : memref<40x32xf32, #tpu.memory_space<any>> -> memref<1x32xf32, #tpu.memory_space<any>>
      %52 = tpu.memref_squeeze %51 : memref<1x32xf32, #tpu.memory_space<any>> -> memref<32xf32, #tpu.memory_space<any>>
      %c0_i32_23 = arith.constant 0 : i32
      %53 = tpu.memref_slice %arg8[%arg10, %c0_i32_23] : memref<16x32xf32, #tpu.memory_space<vmem>> -> memref<1x32xf32, #tpu.memory_space<vmem>>
      %54 = tpu.memref_squeeze %53 : memref<1x32xf32, #tpu.memory_space<vmem>> -> memref<32xf32, #tpu.memory_space<vmem>>
      %55 = tpu.memref_slice %arg9[%c0_i32_21] : memref<1x!tpu.dma_semaphore, #tpu.memory_space<semaphore_mem>> -> memref<1x!tpu.dma_semaphore, #tpu.memory_space<semaphore_mem>>
      %56 = tpu.memref_squeeze %55 : memref<1x!tpu.dma_semaphore, #tpu.memory_space<semaphore_mem>> -> memref<!tpu.dma_semaphore, #tpu.memory_space<semaphore_mem>>
      tpu.enqueue_dma source(%52 : memref<32xf32, #tpu.memory_space<any>>) target(%54 : memref<32xf32, #tpu.memory_space<vmem>>) target_semaphore(%56 : memref<!tpu.dma_semaphore, #tpu.memory_space<semaphore_mem>>)
    }
    %c16_i32_1 = arith.constant 16 : i32
    %2 = tpu.iota {dimensions = array<i32: 1>} : vector<1x256xi32>
    %c0 = arith.constant 0 : index
    %c0_2 = arith.constant 0 : index
    %3 = vector.load %arg2[%c0, %c0_2] : memref<16x3xi32, #tpu.memory_space<vmem>>, vector<16x3xi32>
    %4 = vector.extract_strided_slice %3 {offsets = [0, 0], sizes = [16, 1], strides = [1, 1]} : vector<16x3xi32> to vector<16x1xi32>
    %5 = vector.broadcast %4 : vector<16x1xi32> to vector<16x256xi32>
    %6 = vector.broadcast %2 : vector<1x256xi32> to vector<16x256xi32>
    %7 = arith.cmpi eq, %5, %6 : vector<16x256xi32>
    %8 = vector.extract_strided_slice %3 {offsets = [0, 1], sizes = [16, 1], strides = [1, 1]} : vector<16x3xi32> to vector<16x1xi32>
    %9 = vector.broadcast %8 : vector<16x1xi32> to vector<16x256xi32>
    %10 = vector.broadcast %2 : vector<1x256xi32> to vector<16x256xi32>
    %11 = arith.cmpi eq, %9, %10 : vector<16x256xi32>
    %12 = arith.ori %7, %11 : vector<16x256xi1>
    %13 = vector.extract_strided_slice %3 {offsets = [0, 2], sizes = [16, 1], strides = [1, 1]} : vector<16x3xi32> to vector<16x1xi32>
    %14 = vector.broadcast %13 : vector<16x1xi32> to vector<16x256xi32>
    %15 = vector.broadcast %2 : vector<1x256xi32> to vector<16x256xi32>
    %16 = arith.cmpi eq, %14, %15 : vector<16x256xi32>
    %17 = arith.ori %12, %16 : vector<16x256xi1>
    %18 = arith.extui %17 : vector<16x256xi1> to vector<16x256xi32>
    %19 = arith.sitofp %18 : vector<16x256xi32> to vector<16x256xf32>
    %c0_3 = arith.constant 0 : index
    %c0_4 = arith.constant 0 : index
    %20 = vector.load %arg3[%c0_3, %c0_4] : memref<256x32xf32, #tpu.memory_space<vmem>>, vector<256x32xf32>
    %cst = arith.constant dense<0.000000e+00> : vector<16x32xf32>
    %21 = tpu.matmul %19, %20, %cst {dimension_numbers = #tpu.dot_dimension_numbers<[1], [0], [0], [1], [0, 0, 1, 1], [], []>} : vector<16x256xf32>, vector<256x32xf32>, vector<16x32xf32> -> vector<16x32xf32>
    %c0_i32_5 = arith.constant 0 : i32
    %c16_i32_6 = arith.constant 16 : i32
    %22 = arith.addi %c0_i32_5, %c16_i32_6 : i32
    %c1_i32_7 = arith.constant 1 : i32
    scf.for %arg10 = %c0_i32_5 to %22 step %c1_i32_7  : i32 {
      %c0_i32_21 = arith.constant 0 : i32
      %c0_i32_22 = arith.constant 0 : i32
      %c0_i32_23 = arith.constant 0 : i32
      %c0_i32_24 = arith.constant 0 : i32
      %48 = tpu.memref_slice %arg6[%c0_i32_21, %c0_i32_24] : memref<40x32xf32, #tpu.memory_space<any>> -> memref<1x32xf32, #tpu.memory_space<any>>
      %49 = tpu.memref_squeeze %48 : memref<1x32xf32, #tpu.memory_space<any>> -> memref<32xf32, #tpu.memory_space<any>>
      %c0_i32_25 = arith.constant 0 : i32
      %50 = tpu.memref_slice %arg8[%c0_i32_22, %c0_i32_25] : memref<16x32xf32, #tpu.memory_space<vmem>> -> memref<1x32xf32, #tpu.memory_space<vmem>>
      %51 = tpu.memref_squeeze %50 : memref<1x32xf32, #tpu.memory_space<vmem>> -> memref<32xf32, #tpu.memory_space<vmem>>
      %52 = tpu.memref_slice %arg9[%c0_i32_23] : memref<1x!tpu.dma_semaphore, #tpu.memory_space<semaphore_mem>> -> memref<1x!tpu.dma_semaphore, #tpu.memory_space<semaphore_mem>>
      %53 = tpu.memref_squeeze %52 : memref<1x!tpu.dma_semaphore, #tpu.memory_space<semaphore_mem>> -> memref<!tpu.dma_semaphore, #tpu.memory_space<semaphore_mem>>
      tpu.wait_dma2 semaphore(%53 : memref<!tpu.dma_semaphore, #tpu.memory_space<semaphore_mem>>) src(%49 : memref<32xf32, #tpu.memory_space<any>>) dst(%51 : memref<32xf32, #tpu.memory_space<vmem>>)
    }
    %c0_8 = arith.constant 0 : index
    %c0_9 = arith.constant 0 : index
    %23 = vector.load %arg8[%c0_8, %c0_9] : memref<16x32xf32, #tpu.memory_space<vmem>>, vector<16x32xf32>
    %24 = arith.addf %21, %23 : vector<16x32xf32>
    %cst_10 = arith.constant dense<0.000000e+00> : vector<16xf32>
    %25 = vector.multi_reduction <add>, %24, %cst_10 [1] : vector<16x32xf32> to vector<16xf32>
    %26 = vector.shape_cast %25 : vector<16xf32> to vector<16x1xf32>
    %cst_11 = arith.constant 3.125000e-02 : f32
    %27 = vector.broadcast %cst_11 : f32 to vector<16x1xf32>
    %28 = arith.mulf %26, %27 : vector<16x1xf32>
    %29 = vector.broadcast %28 : vector<16x1xf32> to vector<16x32xf32>
    %30 = arith.subf %24, %29 : vector<16x32xf32>
    %31 = arith.mulf %30, %30 : vector<16x32xf32>
    %cst_12 = arith.constant dense<0.000000e+00> : vector<16xf32>
    %32 = vector.multi_reduction <add>, %31, %cst_12 [1] : vector<16x32xf32> to vector<16xf32>
    %33 = vector.shape_cast %32 : vector<16xf32> to vector<16x1xf32>
    %cst_13 = arith.constant 3.125000e-02 : f32
    %34 = vector.broadcast %cst_13 : f32 to vector<16x1xf32>
    %35 = arith.mulf %33, %34 : vector<16x1xf32>
    %cst_14 = arith.constant 9.99999996E-13 : f32
    %36 = vector.broadcast %cst_14 : f32 to vector<16x1xf32>
    %37 = arith.addf %35, %36 : vector<16x1xf32>
    %38 = math.rsqrt %37 : vector<16x1xf32>
    %39 = vector.broadcast %38 : vector<16x1xf32> to vector<16x32xf32>
    %40 = arith.mulf %30, %39 : vector<16x32xf32>
    %c0_15 = arith.constant 0 : index
    %c0_16 = arith.constant 0 : index
    %41 = vector.load %arg4[%c0_15, %c0_16] : memref<1x32xf32, #tpu.memory_space<vmem>>, vector<1x32xf32>
    %42 = vector.broadcast %41 : vector<1x32xf32> to vector<16x32xf32>
    %43 = arith.mulf %40, %42 : vector<16x32xf32>
    %c0_17 = arith.constant 0 : index
    %c0_18 = arith.constant 0 : index
    %44 = vector.load %arg5[%c0_17, %c0_18] : memref<1x32xf32, #tpu.memory_space<vmem>>, vector<1x32xf32>
    %45 = vector.broadcast %44 : vector<1x32xf32> to vector<16x32xf32>
    %46 = arith.addf %43, %45 : vector<16x32xf32>
    %c0_19 = arith.constant 0 : index
    %c0_20 = arith.constant 0 : index
    %47 = vector.load %arg7[%c0_19, %c0_20] : memref<16x32xf32, #tpu.memory_space<vmem>>, vector<16x32xf32>
    tpu.vector_store %arg7[%c0_19, %c0_20], %46 {strides = array<i32>} : memref<16x32xf32, #tpu.memory_space<vmem>>, vector<16x32xf32>,
    return
  }
  func.func @transform_0(%arg0: i32, %arg1: memref<16xi32, #tpu.memory_space<smem>>) -> (i32, i32) {
    %c0_i32 = arith.constant 0 : i32
    %c0_i32_0 = arith.constant 0 : i32
    return %arg0, %c0_i32 : i32, i32
  }
  func.func @transform_1(%arg0: i32, %arg1: memref<16xi32, #tpu.memory_space<smem>>) -> (i32, i32) {
    %c0_i32 = arith.constant 0 : i32
    %c0_i32_0 = arith.constant 0 : i32
    %c0_i32_1 = arith.constant 0 : i32
    return %c0_i32, %c0_i32_0 : i32, i32
  }
  func.func @transform_2(%arg0: i32, %arg1: memref<16xi32, #tpu.memory_space<smem>>) -> (i32, i32) {
    %c0_i32 = arith.constant 0 : i32
    %c0_i32_0 = arith.constant 0 : i32
    %c0_i32_1 = arith.constant 0 : i32
    return %c0_i32, %c0_i32_0 : i32, i32
  }
  func.func @transform_3(%arg0: i32, %arg1: memref<16xi32, #tpu.memory_space<smem>>) -> (i32, i32) {
    %c0_i32 = arith.constant 0 : i32
    %c0_i32_0 = arith.constant 0 : i32
    %c0_i32_1 = arith.constant 0 : i32
    return %c0_i32, %c0_i32_0 : i32, i32
  }
  func.func @transform_5(%arg0: i32, %arg1: memref<16xi32, #tpu.memory_space<smem>>) -> (i32, i32) {
    %c0_i32 = arith.constant 0 : i32
    %c0_i32_0 = arith.constant 0 : i32
    return %arg0, %c0_i32 : i32, i32
  }
}

</mosaic_0001>

<llo_original>
// kernel: tpu_custom_call.1
$region0: #{tpu_custom_call.1}
  #allocation0 [shape = 'u32[]', space=smem, size = 0x4, offset = 0x4, fixed_abs, tag = 'smem constant byte address 0x4 - core index']
  #allocation1 [shape = 'u32[144,128]{1,0:T(1,128)}', space=vmem, size = 0x12000, scoped, tag = 'internal scratch']
  #allocation2 [shape = 'f32[16,32]{1,0:T(8,128)}', space=vmem, size = 0x2000, scoped, tag = 'scratch operand']
  #allocation3 [shape = 's32[1]{0}', space=sflag, size = 0x4, scoped, tag = 'scratch operand']
  #allocation4 [shape = 's32[1]{0}', space=sflag, size = 0x4, scoped, tag = 'scoped memory for tpu_custom_call.1']
  #allocation5 [shape = 'u8[512]{0}', space=smem, size = 0x200, scoped, tag = 'prefetched SMEM operand 0']
  #allocation8 [shape = 's32[]', space=sflag, size = 0x4, offset = 0, fixed_abs, tag = 'sflag constant byte address 0x0 - dummy sync flag']
  %s0 = inlined_call_operand.vmem [shape: s32[16], index: 0, kind: input, shape index: {}]
  %s1 = inlined_call_operand.vmem [shape: s32[16,3], index: 1, kind: input, shape index: {}]
  %s2 = inlined_call_operand.vmem [shape: f32[256,32], index: 2, kind: input, shape index: {}]
  %s3 = inlined_call_operand.vmem [shape: f32[1,32], index: 3, kind: input, shape index: {}]
  %s4 = inlined_call_operand.vmem [shape: f32[1,32], index: 4, kind: input, shape index: {}]
  %s5 = inlined_call_operand.vmem [shape: f32[40,32], index: 5, kind: input, shape index: {}]
  %s6 = inlined_call_operand.hbm [shape: f32[16,32], index: 6, kind: output, shape index: {}]
  %s7 = sld [smem:[#allocation0]]
  $region70: #{tpu_custom_call.1} parent=0
    _
  %s9 = ssub.s32 1, %s7
  %s10 = scalar_select 0, %s9, %s7
  %s11 = sshll.u32 %s0, 4
  %s12 = int_to_ptr.vmem [resolvable:$true] %s11
  %14 = dma.vmem_to_smem %s12, 16, [#allocation5], [#allocation4]
  %15 = dma.done [#allocation4], 16
  %16 = sfence
  $region1: #{tpu_custom_call.1} parent=0
    #allocation6 [shape = 'u8[8192]{0}', space=vmem, size = 0x2000, scoped, tag = 'output window, operand 0, single buffered']
    #allocation7 [shape = 's32[1]{0}', space=sflag, size = 0x4, scoped, tag = 'scoped memory for tpu_custom_call.1']
    %17 = vsyncpa [#allocation7], 0
    // Predicated region
    $region2: #{tpu_custom_call.1} parent=1 // pred_check
      _
    $region3: #{tpu_custom_call.1} parent=1 // pred_check_branch
      %19 = sbr.rel (0) target = $region5
    $region4: #{tpu_custom_call.1} parent=1 // pred_region
      _
    $region5: #{tpu_custom_call.1} parent=1 // pred_fallthru
      _
    // Predicated region
    $region6: #{tpu_custom_call.1} parent=1 // pred_check
      _
    $region7: #{tpu_custom_call.1} parent=1 // pred_check_branch
      %21 = sbr.rel (0) target = $region9
    $region8: #{tpu_custom_call.1} parent=1 // pred_region
      _
    $region9: #{tpu_custom_call.1} parent=1 // pred_fallthru
      _
    // Predicated region
    $region10: #{tpu_custom_call.1} parent=1 // pred_check
      _
    $region11: #{tpu_custom_call.1} parent=1 // pred_check_branch
      %23 = sbr.rel (0) target = $region13
    $region12: #{tpu_custom_call.1} parent=1 // pred_region
      _
    $region13: #{tpu_custom_call.1} parent=1 // pred_fallthru
      _
    // Predicated region
    $region14: #{tpu_custom_call.1} parent=1 // pred_check
      _
    $region15: #{tpu_custom_call.1} parent=1 // pred_check_branch
      %25 = sbr.rel (0) target = $region17
    $region16: #{tpu_custom_call.1} parent=1 // pred_region
      _
    $region17: #{tpu_custom_call.1} parent=1 // pred_fallthru
      _
    %s26 = smul.u32 0, 16
    loop: start=0, step=1, limit=16
    $region18: #{tpu_custom_call.1} parent=1 // loop_pre_header
      _
    $region19: #{tpu_custom_call.1} parent=1 // loop_header
      %s28 = sphi 0, %s32
      %p29 = scmp.ge.s32.totalorder %s28, 16
    $region20: #{tpu_custom_call.1} parent=1 // loop_header_branch
      %31 = sbr.rel (%p29) target = $region24
    $region21: #{tpu_custom_call.1} parent=1 // loop_body
      %s33 = sadd.s32 %s26, %s28
      %s34 = sld [smem:[#allocation5 + %s33]]
      %s35 = scalar_lea.vmem %s5, %s34
      %s36 = scalar_lea.vmem [#allocation2], %s28
      %p38 = scmp.lt.u32.totalorder 1, 8
      %p39 = pneg %p38
      // Predicated region
      $region25: #{tpu_custom_call.1} parent=21 // pred_check
        _
      $region26: #{tpu_custom_call.1} parent=21 // pred_check_branch
        %41 = sbr.rel (%p38) target = $region28
      $region27: #{tpu_custom_call.1} parent=21 // pred_region
        %s57 = sand.u32 1, 7
        %p58 = scmp.eq.s32.totalorder %s57, 0
        %p59 = pneg %p58
        // Predicated region
        $region40: #{tpu_custom_call.1} parent=27 // pred_check
          _
        $region41: #{tpu_custom_call.1} parent=27 // pred_check_branch
          %61 = sbr.rel (%p58) target = $region43
        $region42: #{tpu_custom_call.1} parent=27 // pred_region
          %s62 = sand.u32 1, 7
          %s63 = ssub.s32 1, %s62
          %s64 = scalar_lea.vmem %s35, %s63
          %s65 = ssub.s32 1, %s62
          %s66 = scalar_lea.vmem %s36, %s65 [#allocation2]
          %s67 = sshll.u32 1, %s62
          %s68 = ssub.s32 %s67, 1
          loop: start=0, step=1, limit=1
          $region44: #{tpu_custom_call.1} parent=42 // loop_pre_header
            _
          $region45: #{tpu_custom_call.1} parent=42 // loop_header
            %s70 = sphi 0, %s74
            %p71 = scmp.ge.s32.totalorder %s70, 1
            %s75 = sphi %s64, %s64
            %s76 = sphi %s66, %s66
          $region46: #{tpu_custom_call.1} parent=42 // loop_header_branch
            %73 = sbr.rel (%p71) target = $region50
          $region47: #{tpu_custom_call.1} parent=42 // loop_body
            %v77 = vld [vmem:[%s75] sm:%s68]
            %78 = vst [vmem:[%s76] sm:%s68] %v77
          $region48: #{tpu_custom_call.1} parent=42 // loop_footer
            %s74 = sadd.s32 1, %s70
          $region49: #{tpu_custom_call.1} parent=42 // loop_footer_branch
            %69 = sbr.rel target = $region45
          $region50: #{tpu_custom_call.1} parent=42 // loop_exit
            _
        $region43: #{tpu_custom_call.1} parent=27 // pred_fallthru
          _
      $region28: #{tpu_custom_call.1} parent=21 // pred_fallthru
        _
      // Predicated region
      $region29: #{tpu_custom_call.1} parent=21 // pred_check
        %p42 = pneg %p38
      $region30: #{tpu_custom_call.1} parent=21 // pred_check_branch
        %44 = sbr.rel (%p42) target = $region32
      $region31: #{tpu_custom_call.1} parent=21 // pred_region
        %s45 = sshll.u32 1, 1
        %s46 = ssub.s32 %s45, 1
        loop: start=0, step=1, limit=1
        $region33: #{tpu_custom_call.1} parent=31 // loop_pre_header
          _
        $region34: #{tpu_custom_call.1} parent=31 // loop_header
          %s48 = sphi 0, %s52
          %p49 = scmp.ge.s32.totalorder %s48, 1
          %s53 = sphi %s35, %s35
          %s54 = sphi %s36, %s36
        $region35: #{tpu_custom_call.1} parent=31 // loop_header_branch
          %51 = sbr.rel (%p49) target = $region39
        $region36: #{tpu_custom_call.1} parent=31 // loop_body
          %v55 = vld [vmem:[%s53] sm:%s46]
          %56 = vst [vmem:[%s54] sm:%s46] %v55
        $region37: #{tpu_custom_call.1} parent=31 // loop_footer
          %s52 = sadd.s32 1, %s48
        $region38: #{tpu_custom_call.1} parent=31 // loop_footer_branch
          %47 = sbr.rel target = $region34
        $region39: #{tpu_custom_call.1} parent=31 // loop_exit
          _
      $region32: #{tpu_custom_call.1} parent=21 // pred_fallthru
        _
      // Predicated region
      $region51: #{tpu_custom_call.1} parent=21 // pred_check
        _
      $region52: #{tpu_custom_call.1} parent=21 // pred_check_branch
        %81 = sbr.rel (0) target = $region54
      $region53: #{tpu_custom_call.1} parent=21 // pred_region
        %82 = vsyncadd [#allocation3], 16
      $region54: #{tpu_custom_call.1} parent=21 // pred_fallthru
        _
    $region22: #{tpu_custom_call.1} parent=1 // loop_footer
      %s32 = sadd.s32 1, %s28
    $region23: #{tpu_custom_call.1} parent=1 // loop_footer_branch
      %27 = sbr.rel target = $region19
    $region24: #{tpu_custom_call.1} parent=1 // loop_exit
      _
    %v83 = vlaneseq
    %v84 = vand.u32 %v83, 127
    %v85 = vadd.s32 %v84, 128
    %v86 = vld [vmem:[%s1] sm:$0xff]
    %v87 = vld [vmem:[%s1 + $0x8] sm:$0xff]
    %88 = vset.pattern.permute.xlu0 0
    %89 = vperm.xlu0 %88, %v86
    %v90 = vpop.permute.xlu0 %89
    %91 = vset.pattern.permute.xlu0 0
    %92 = vperm.xlu0 %91, %v87
    %v93 = vpop.permute.xlu0 %92
    %vm94 = vcmp.eq.s32.totalorder %v90, %v84
    %vm95 = vcmp.eq.s32.totalorder %v90, %v85
    %vm96 = vcmp.eq.s32.totalorder %v93, %v84
    %vm97 = vcmp.eq.s32.totalorder %v93, %v85
    %98 = vset.pattern.permute.xlu0 1
    %99 = vperm.xlu0 %98, %v86
    %v100 = vpop.permute.xlu0 %99
    %101 = vset.pattern.permute.xlu0 1
    %102 = vperm.xlu0 %101, %v87
    %v103 = vpop.permute.xlu0 %102
    %vm104 = vcmp.eq.s32.totalorder %v100, %v84
    %vm105 = vcmp.eq.s32.totalorder %v100, %v85
    %vm106 = vcmp.eq.s32.totalorder %v103, %v84
    %vm107 = vcmp.eq.s32.totalorder %v103, %v85
    %vm108 = vmor %vm94, %vm104
    %vm109 = vmor %vm95, %vm105
    %vm110 = vmor %vm96, %vm106
    %vm111 = vmor %vm97, %vm107
    %112 = vset.pattern.permute.xlu0 2
    %113 = vperm.xlu0 %112, %v86
    %v114 = vpop.permute.xlu0 %113
    %115 = vset.pattern.permute.xlu0 2
    %116 = vperm.xlu0 %115, %v87
    %v117 = vpop.permute.xlu0 %116
    %vm118 = vcmp.eq.s32.totalorder %v114, %v84
    %vm119 = vcmp.eq.s32.totalorder %v114, %v85
    %vm120 = vcmp.eq.s32.totalorder %v117, %v84
    %vm121 = vcmp.eq.s32.totalorder %v117, %v85
    %vm122 = vmor %vm108, %vm118
    %vm123 = vmor %vm109, %vm119
    %vm124 = vmor %vm110, %vm120
    %vm125 = vmor %vm111, %vm121
    %v126 = vsel %vm122, 1, 0
    %v127 = vsel %vm123, 1, 0
    %v128 = vsel %vm124, 1, 0
    %v129 = vsel %vm125, 1, 0
    %v130 = vcvt.s32.f32 %v126
    %v131 = vcvt.s32.f32 %v127
    %v132 = vcvt.s32.f32 %v128
    %v133 = vcvt.s32.f32 %v129
    %v134 = vld [vmem:[%s2] sm:$0xff]
    %v135 = vld [vmem:[%s2 + $0x8] sm:$0xff]
    %v136 = vld [vmem:[%s2 + $0x10] sm:$0xff]
    %v137 = vld [vmem:[%s2 + $0x18] sm:$0xff]
    %v138 = vld [vmem:[%s2 + $0x20] sm:$0xff]
    %v139 = vld [vmem:[%s2 + $0x28] sm:$0xff]
    %v140 = vld [vmem:[%s2 + $0x30] sm:$0xff]
    %v141 = vld [vmem:[%s2 + $0x38] sm:$0xff]
    %v142 = vld [vmem:[%s2 + $0x40] sm:$0xff]
    %v143 = vld [vmem:[%s2 + $0x48] sm:$0xff]
    %v144 = vld [vmem:[%s2 + $0x50] sm:$0xff]
    %v145 = vld [vmem:[%s2 + $0x58] sm:$0xff]
    %v146 = vld [vmem:[%s2 + $0x60] sm:$0xff]
    %v147 = vld [vmem:[%s2 + $0x68] sm:$0xff]
    %v148 = vld [vmem:[%s2 + $0x70] sm:$0xff]
    %v149 = vld [vmem:[%s2 + $0x78] sm:$0xff]
    %v150 = vld [vmem:[%s2 + $0x80] sm:$0xff]
    %v151 = vld [vmem:[%s2 + $0x88] sm:$0xff]
    %v152 = vld [vmem:[%s2 + $0x90] sm:$0xff]
    %v153 = vld [vmem:[%s2 + $0x98] sm:$0xff]
    %v154 = vld [vmem:[%s2 + $0xa0] sm:$0xff]
    %v155 = vld [vmem:[%s2 + $0xa8] sm:$0xff]
    %v156 = vld [vmem:[%s2 + $0xb0] sm:$0xff]
    %v157 = vld [vmem:[%s2 + $0xb8] sm:$0xff]
    %v158 = vld [vmem:[%s2 + $0xc0] sm:$0xff]
    %v159 = vld [vmem:[%s2 + $0xc8] sm:$0xff]
    %v160 = vld [vmem:[%s2 + $0xd0] sm:$0xff]
    %v161 = vld [vmem:[%s2 + $0xd8] sm:$0xff]
    %v162 = vld [vmem:[%s2 + $0xe0] sm:$0xff]
    %v163 = vld [vmem:[%s2 + $0xe8] sm:$0xff]
    %v164 = vld [vmem:[%s2 + $0xf0] sm:$0xff]
    %v165 = vld [vmem:[%s2 + $0xf8] sm:$0xff]
    loop: start=0, step=1, limit=16
    $region55: #{tpu_custom_call.1} parent=1 // loop_pre_header
      _
    $region56: #{tpu_custom_call.1} parent=1 // loop_header
      %s167 = sphi 0, %s171
      %p168 = scmp.ge.s32.totalorder %s167, 16
    $region57: #{tpu_custom_call.1} parent=1 // loop_header_branch
      %170 = sbr.rel (%p168) target = $region61
    $region58: #{tpu_custom_call.1} parent=1 // loop_body
      %173 = dma.done [#allocation3], 16
    $region59: #{tpu_custom_call.1} parent=1 // loop_footer
      %s171 = sadd.s32 1, %s167
    $region60: #{tpu_custom_call.1} parent=1 // loop_footer_branch
      %166 = sbr.rel target = $region56
    $region61: #{tpu_custom_call.1} parent=1 // loop_exit
      _
    %v174 = vld [vmem:[#allocation2] sm:$0xff]
    %v175 = vld [vmem:[#allocation2 + $0x8] sm:$0xff]
    %176 = vmatprep.subr.mxu0 0.0
    %177 = vmatpush1.msra.mxu0 %v149
    %178 = vmatprep.subr.mxu0 0.0
    %179 = vmatpush1.msra.mxu0 %v148
    %180 = vmatprep.subr.mxu0 0.0
    %181 = vmatpush1.msra.mxu0 %v147
    %182 = vmatprep.subr.mxu0 0.0
    %183 = vmatpush1.msra.mxu0 %v146
    %184 = vmatprep.subr.mxu0 0.0
    %185 = vmatpush1.msra.mxu0 %v145
    %186 = vmatprep.subr.mxu0 0.0
    %187 = vmatpush1.msra.mxu0 %v144
    %188 = vmatprep.subr.mxu0 0.0
    %189 = vmatpush1.msra.mxu0 %v143
    %190 = vmatprep.subr.mxu0 0.0
    %191 = vmatpush1.msra.mxu0 %v142
    %192 = vmatprep.subr.mxu0 0.0
    %193 = vmatpush1.msra.mxu0 %v141
    %194 = vmatprep.subr.mxu0 0.0
    %195 = vmatpush1.msra.mxu0 %v140
    %196 = vmatprep.subr.mxu0 0.0
    %197 = vmatpush1.msra.mxu0 %v139
    %198 = vmatprep.subr.mxu0 0.0
    %199 = vmatpush1.msra.mxu0 %v138
    %200 = vmatprep.subr.mxu0 0.0
    %201 = vmatpush1.msra.mxu0 %v137
    %202 = vmatprep.subr.mxu0 0.0
    %203 = vmatpush1.msra.mxu0 %v136
    %204 = vmatprep.subr.mxu0 0.0
    %205 = vmatpush1.msra.mxu0 %v135
    %206 = vmatprep.subr.mxu0 0.0
    %207 = vmatpush1.msra.mxu0 %v134
    %208 = vmatprep.subr.mxu0 0.0
    %209 = vmatpush2.msra.mxu0 %v165
    %210 = vmatprep.subr.mxu0 0.0
    %211 = vmatpush2.msra.mxu0 %v164
    %212 = vmatprep.subr.mxu0 0.0
    %213 = vmatpush2.msra.mxu0 %v163
    %214 = vmatprep.subr.mxu0 0.0
    %215 = vmatpush2.msra.mxu0 %v162
    %216 = vmatprep.subr.mxu0 0.0
    %217 = vmatpush2.msra.mxu0 %v161
    %218 = vmatprep.subr.mxu0 0.0
    %219 = vmatpush2.msra.mxu0 %v160
    %220 = vmatprep.subr.mxu0 0.0
    %221 = vmatpush2.msra.mxu0 %v159
    %222 = vmatprep.subr.mxu0 0.0
    %223 = vmatpush2.msra.mxu0 %v158
    %224 = vmatprep.subr.mxu0 0.0
    %225 = vmatpush2.msra.mxu0 %v157
    %226 = vmatprep.subr.mxu0 0.0
    %227 = vmatpush2.msra.mxu0 %v156
    %228 = vmatprep.subr.mxu0 0.0
    %229 = vmatpush2.msra.mxu0 %v155
    %230 = vmatprep.subr.mxu0 0.0
    %231 = vmatpush2.msra.mxu0 %v154
    %232 = vmatprep.subr.mxu0 0.0
    %233 = vmatpush2.msra.mxu0 %v153
    %234 = vmatprep.subr.mxu0 0.0
    %235 = vmatpush2.msra.mxu0 %v152
    %236 = vmatprep.subr.mxu0 0.0
    %237 = vmatpush2.msra.mxu0 %v151
    %238 = vmatprep.subr.mxu0 0.0
    %239 = vmatpush2.msra.mxu0 %v150
    %240 = vmatprep.mubr.f32.mxu0 %v131
    %241 = vmatmul.mubr.f32.gmra.mxu0 %v130
    %v242 = vpop.f32.mrf.mxu0
    %v243 = vadd.f32 %v174, %v242
    %v244 = vpop.f32.mrf.mxu0
    %245 = vmatprep.mubr.f32.mxu0 %v133
    %246 = vmatmul.mubr.f32.gmra.mxu0 %v132
    %v247 = vpop.f32.mrf.mxu0
    %v248 = vadd.f32 %v175, %v247
    %v249 = vpop.f32.mrf.mxu0
    %250 = vdwg.mxu0
    %vm251 = vcmask 261120
    %v252 = vsel %vm251, %v243, 0.0
    %253 = vadd.xlane.f32.xlu0 %v252
    %v254 = vpop.xlane.xlu0 %253
    %v255 = vsel %vm251, %v248, 0.0
    %256 = vadd.xlane.f32.xlu0 %v255
    %v257 = vpop.xlane.xlu0 %256
    %v258 = vmul.f32 %v254, 0.03125
    %v259 = vmul.f32 %v257, 0.03125
    %v260 = vsub.f32 %v243, %v258
    %v261 = vsub.f32 %v248, %v259
    %v262 = vmul.f32 %v260, %v260
    %v263 = vmul.f32 %v261, %v261
    %v264 = vsel %vm251, %v262, 0.0
    %265 = vadd.xlane.f32.xlu0 %v264
    %v266 = vpop.xlane.xlu0 %265
    %v267 = vsel %vm251, %v263, 0.0
    %268 = vadd.xlane.f32.xlu0 %v267
    %v269 = vpop.xlane.xlu0 %268
    %v270 = vmul.f32 %v266, 0.03125
    %v271 = vmul.f32 %v269, 0.03125
    %v272 = vadd.f32 %v270, 1e-12
    %v273 = vadd.f32 %v271, 1e-12
    %v274 = vrsqrt.pop %v272
    %v275 = vrsqrt.pop %v273
    %v276 = vmul.f32 %v260, %v274
    %v277 = vmul.f32 %v261, %v275
    %v278 = vld [vmem:[%s3] sm:$0x1]
    %v280 = vlaneseq
    %v281 = vshrl.u32 %v280, 7
    %v282 = vsub.s32 0, %v281
    %v283 = vrot.slane %v278, %v282
    %v285 = vmul.f32 %v276, %v283
    %v286 = vmul.f32 %v277, %v283
    %v287 = vld [vmem:[%s4] sm:$0x1]
    %v289 = vlaneseq
    %v290 = vshrl.u32 %v289, 7
    %v291 = vsub.s32 0, %v290
    %v292 = vrot.slane %v287, %v291
    %v294 = vadd.f32 %v285, %v292
    %v295 = vadd.f32 %v286, %v292
    %296 = vst.msk [vmem:[#allocation6] sm:$0xff] %vm251, %v294
    %297 = vst.msk [vmem:[#allocation6 + $0x8] sm:$0xff] %vm251, %v295
    // Predicated region
    $region62: #{tpu_custom_call.1} parent=1 // pred_check
      _
    $region63: #{tpu_custom_call.1} parent=1 // pred_check_branch
      %299 = sbr.rel (0) target = $region65
    $region64: #{tpu_custom_call.1} parent=1 // pred_region
      %s301 = ssub.s32 256, 256
      %302 = vsyncadd [#allocation7], %s301
      %s303 = sshll.u32 [#allocation6], 4
      %s304 = int_to_ptr.vmem [resolvable:$true] %s303
      %309 = dma.vmem_to_hbm [thread:$0]  %s304, 256, %s6, [#allocation7], 128, 128, 8
    $region65: #{tpu_custom_call.1} parent=1 // pred_fallthru
      _
    // Predicated region
    $region66: #{tpu_custom_call.1} parent=1 // pred_check
      _
    $region67: #{tpu_custom_call.1} parent=1 // pred_check_branch
      %311 = sbr.rel (0) target = $region69
    $region68: #{tpu_custom_call.1} parent=1 // pred_region
      %312 = dma.done [#allocation7], 256
    $region69: #{tpu_custom_call.1} parent=1 // pred_fallthru
      _
    %313 = vsyncpa [#allocation7], 1
  %314 = vsyncmov [#allocation3]
  %s315 = vpop.sfrf %314
  %p316 = scmp.eq.s32.totalorder %s315, 0
  %p317 = pneg %p316
  %319 = shalt.err (%p317)

</llo_original>
